<compile_context>
chip_gen: v7x
topology: tpu7x:2x2x1
jax: 0.10.0
libtpu: 0.0.40
codegen_flags: <defaults>
</compile_context>

<pallas_src>
import jax
import jax.numpy as jnp
from jax.experimental import pallas as pl
from jax.experimental.pallas import tpu as pltpu

BN_EPS = 1e-5


def _round_up(x, m):
    return ((x + m - 1) // m) * m


def _default_batch_tile():
    # 256 fills the 256-deep MXU on v6e/v7x; 128 is enough on v5e.
    try:
        kind = jax.devices()[0].device_kind.lower()
    except Exception:
        return 256
    if "v5 lite" in kind or "v5e" in kind or "v5lite" in kind:
        return 128
    return 256


def _make_stats_kernel(tb, b_valid):
    """Phase 0: per-tile sum / sum-of-squares of relu(state @ w1 + b1)."""

    def stats_kernel(state_ref, w1_ref, b1_ref, sum_ref, sumsq_ref):
        h1 = jnp.dot(state_ref[...], w1_ref[...],
                     preferred_element_type=jnp.float32) + b1_ref[...]
        h1 = jnp.maximum(h1, 0.0)
        if b_valid is not None:  # mask batch-padding rows out of the statistics
            row = (pl.program_id(0) * tb
                   + jax.lax.broadcasted_iota(jnp.int32, h1.shape, 0))
            h1 = jnp.where(row < b_valid, h1, 0.0)
        s = jnp.sum(h1, axis=0, keepdims=True)         # (1, H1)
        ss = jnp.sum(h1 * h1, axis=0, keepdims=True)   # (1, H1)
        sum_ref[...] = s[None]                         # (1, 1, H1)
        sumsq_ref[...] = ss[None]                      # (1, 1, H1)

    return stats_kernel


def _compute_kernel(state_ref, action_ref, scale_ref, shift_ref,
                    w1_ref, b1_ref, w2s_ref, w2a_ref, b2_ref,
                    w3_ref, b3_ref, out_ref):
    """Phase 1: fc1 -> BN(scale/shift) -> fc2(split concat) -> fc3(VPU dot)."""
    h1 = jnp.dot(state_ref[...], w1_ref[...],
                 preferred_element_type=jnp.float32) + b1_ref[...]
    h1 = jnp.maximum(h1, 0.0)

    # BatchNorm folded to a single per-feature scale/shift (gamma/beta/mean/var
    # pre-fused in the wrapper), then cast to bf16 for the MXU.
    xs = (h1 * scale_ref[...] + shift_ref[...]).astype(jnp.bfloat16)

    # fc2 over concat([xs, action]) == xs @ W2s + action @ W2a (+ bias).
    h2 = (jnp.dot(xs, w2s_ref[...], preferred_element_type=jnp.float32)
          + jnp.dot(action_ref[...], w2a_ref[...],
                    preferred_element_type=jnp.float32)
          + b2_ref[...])
    h2 = jnp.maximum(h2, 0.0)

    # fc3 (128 -> 1): VPU multiply + lane reduce instead of an N=1 MXU matmul.
    out_ref[...] = (jnp.sum(h2 * w3_ref[...], axis=-1, keepdims=True)
                    + b3_ref[...])


def critic_forward(state, action, params, *, batch_tile=None):
    if state.ndim == 1:
        state = state[None, :]
    if action.ndim == 1:
        action = action[None, :]

    B, S = state.shape
    A = action.shape[1]
    H1 = params["w1_t"].shape[1]
    H2 = params["w2s_t"].shape[1]

    tb = batch_tile if batch_tile is not None else _default_batch_tile()
    TB = min(tb, _round_up(B, 8))
    Bp = _round_up(B, TB)
    num_tiles = Bp // TB

    # bf16 matmul operands (f32 accumulation inside the kernels).
    state_bf = state.astype(jnp.bfloat16)
    action_bf = action.astype(jnp.bfloat16)
    if Bp != B:
        state_bf = jnp.pad(state_bf, ((0, Bp - B), (0, 0)))
        action_bf = jnp.pad(action_bf, ((0, Bp - B), (0, 0)))
    w1 = params["w1_t"].astype(jnp.bfloat16)
    w2s = params["w2s_t"].astype(jnp.bfloat16)
    w2a = params["w2a_t"].astype(jnp.bfloat16)
    b1, b2, b3 = params["b1"], params["b2"], params["b3"]
    w3_row = params["w3_row"]

    compiler_params = pltpu.CompilerParams(
        dimension_semantics=("parallel",),     # batch tiles are independent
        vmem_limit_bytes=32 * 1024 * 1024,     # explicit, safe on v5e/v6e/v7x
    )

    # ---- Phase 0: per-tile partial sums for full-batch BatchNorm statistics.
    psum, psumsq = pl.pallas_call(
        _make_stats_kernel(TB, B if Bp != B else None),
        out_shape=(jax.ShapeDtypeStruct((num_tiles, 1, H1), jnp.float32),
                   jax.ShapeDtypeStruct((num_tiles, 1, H1), jnp.float32)),
        grid=(num_tiles,),
        in_specs=[
            pl.BlockSpec((TB, S), lambda j: (j, 0)),   # state tile (streamed)
            pl.BlockSpec((S, H1), lambda j: (0, 0)),   # w1 (VMEM-resident)
            pl.BlockSpec((1, H1), lambda j: (0, 0)),   # b1
        ],
        out_specs=(pl.BlockSpec((1, 1, H1), lambda j: (j, 0, 0)),
                   pl.BlockSpec((1, 1, H1), lambda j: (j, 0, 0))),
        compiler_params=compiler_params,
    )(state_bf, w1, b1)

    # ---- Tiny XLA glue (128-element vectors): finish stats, fold gamma/beta.
    total = jnp.sum(psum, axis=(0, 1))
    total_sq = jnp.sum(psumsq, axis=(0, 1))
    mean = total / B
    var = jnp.maximum(total_sq / B - mean * mean, 0.0)   # biased batch variance
    inv_std = jax.lax.rsqrt(var + BN_EPS)
    scale = (params["gamma"].reshape(-1) * inv_std).reshape(1, H1)
    shift = (params["beta"].reshape(-1) - mean * scale.reshape(-1)).reshape(1, H1)

    # ---- Phase 1: normalize + fc2 + fc3, tiled over the batch.
    out = pl.pallas_call(
        _compute_kernel,
        out_shape=jax.ShapeDtypeStruct((Bp, 1), jnp.float32),
        grid=(num_tiles,),
        in_specs=[
            pl.BlockSpec((TB, S), lambda j: (j, 0)),    # state tile
            pl.BlockSpec((TB, A), lambda j: (j, 0)),    # action tile
            pl.BlockSpec((1, H1), lambda j: (0, 0)),    # BN scale (f32)
            pl.BlockSpec((1, H1), lambda j: (0, 0)),    # BN shift (f32)
            pl.BlockSpec((S, H1), lambda j: (0, 0)),    # w1
            pl.BlockSpec((1, H1), lambda j: (0, 0)),    # b1
            pl.BlockSpec((H1, H2), lambda j: (0, 0)),   # w2 (state part)
            pl.BlockSpec((A, H2), lambda j: (0, 0)),    # w2 (action part)
            pl.BlockSpec((1, H2), lambda j: (0, 0)),    # b2
            pl.BlockSpec((1, H2), lambda j: (0, 0)),    # w3 as a lane row
            pl.BlockSpec((1, 1), lambda j: (0, 0)),     # b3
        ],
        out_specs=pl.BlockSpec((TB, 1), lambda j: (j, 0)),
        compiler_params=compiler_params,
    )(state_bf, action_bf, scale, shift, w1, b1, w2s, w2a, b2, w3_row, b3)

    return out[:B]


def init_params(key, state_size, action_size, fcs1_units=128, fc2_units=128):
    """Deterministic init mimicking the PyTorch module's reset_parameters()."""
    ks = jax.random.split(key, 6)

    # NOTE: hidden_init in the reference uses weight.size(0) == out_features as
    # "fan_in"; we reproduce that range choice (it only affects init values).
    lim1 = 1.0 / jnp.sqrt(float(fcs1_units))
    w1 = jax.random.uniform(ks[0], (fcs1_units, state_size), jnp.float32, -lim1, lim1)
    b1 = jax.random.uniform(ks[1], (1, fcs1_units), jnp.float32,
                            -1.0 / jnp.sqrt(float(state_size)),
                            1.0 / jnp.sqrt(float(state_size)))

    lim2 = 1.0 / jnp.sqrt(float(fc2_units))
    in2 = fcs1_units + action_size
    w2 = jax.random.uniform(ks[2], (fc2_units, in2), jnp.float32, -lim2, lim2)
    b2 = jax.random.uniform(ks[3], (1, fc2_units), jnp.float32,
                            -1.0 / jnp.sqrt(float(in2)), 1.0 / jnp.sqrt(float(in2)))

    w3 = jax.random.uniform(ks[4], (1, fc2_units), jnp.float32, -3e-3, 3e-3)
    b3 = jax.random.uniform(ks[5], (1, 1), jnp.float32,
                            -1.0 / jnp.sqrt(float(fc2_units)),
                            1.0 / jnp.sqrt(float(fc2_units)))

    gamma = jnp.ones((1, fcs1_units), jnp.float32)   # BatchNorm1d defaults
    beta = jnp.zeros((1, fcs1_units), jnp.float32)

    return {
        "w1_t": w1.T,                          # (state_size, fcs1_units)
        "b1": b1,
        "gamma": gamma,
        "beta": beta,
        "w2s_t": w2[:, :fcs1_units].T,         # (fcs1_units, fc2_units)
        "w2a_t": w2[:, fcs1_units:].T,         # (action_size, fc2_units)
        "b2": b2,
        "w3_row": w3,                          # (1, fc2_units) lane row for VPU dot
        "b3": b3,
    }


def critic_reference_f32(state, action, params):
    """Full-f32 reference with the original module's math (two-pass BN)."""
    h1 = jnp.maximum(state @ params["w1_t"] + params["b1"], 0.0)
    mean = jnp.mean(h1, axis=0, keepdims=True)
    var = jnp.mean((h1 - mean) ** 2, axis=0, keepdims=True)
    xs = (h1 - mean) / jnp.sqrt(var + BN_EPS) * params["gamma"] + params["beta"]
    h2 = jnp.maximum(xs @ params["w2s_t"] + action @ params["w2a_t"] + params["b2"], 0.0)
    return h2 @ params["w3_row"].T + params["b3"]


def critic_reference_matched(state, action, params):
    """Pure-JAX reference mirroring the kernel numerics (bf16 matmul operands,
    f32 accumulation, one-pass BN statistics) for a tight correctness check."""
    B = state.shape[0]
    sb = state.astype(jnp.bfloat16)
    ab = action.astype(jnp.bfloat16)
    w1 = params["w1_t"].astype(jnp.bfloat16)
    w2s = params["w2s_t"].astype(jnp.bfloat16)
    w2a = params["w2a_t"].astype(jnp.bfloat16)
    h1 = jnp.maximum(jnp.dot(sb, w1, preferred_element_type=jnp.float32)
                     + params["b1"], 0.0)
    mean = jnp.sum(h1, axis=0) / B
    var = jnp.maximum(jnp.sum(h1 * h1, axis=0) / B - mean * mean, 0.0)
    inv_std = jax.lax.rsqrt(var + BN_EPS)
    scale = params["gamma"].reshape(-1) * inv_std
    shift = params["beta"].reshape(-1) - mean * scale
    xs = (h1 * scale + shift).astype(jnp.bfloat16)
    h2 = jnp.maximum(jnp.dot(xs, w2s, preferred_element_type=jnp.float32)
                     + jnp.dot(ab, w2a, preferred_element_type=jnp.float32)
                     + params["b2"], 0.0)
    return jnp.sum(h2 * params["w3_row"], axis=-1, keepdims=True) + params["b3"]


# TODO(synk): BatchNorm1d running_mean / running_var buffer updates (training-time
# side effect) are not produced; only the forward output is computed.

if __name__ == "__main__":
    B, STATE_SIZE, ACTION_SIZE = 8, 16, 4

    key = jax.random.PRNGKey(0)
    k_state, k_action, k_params = jax.random.split(key, 3)

    state = jax.random.normal(k_state, (B, STATE_SIZE), jnp.float32)
    action = jax.random.uniform(k_action, (B, ACTION_SIZE), jnp.float32, -1.0, 1.0)
    params = init_params(k_params, STATE_SIZE, ACTION_SIZE)

    out = critic_forward(state, action, params)
    out = jax.block_until_ready(out)
    assert out.shape == (B, 1)

    # Tight check vs a reference that mirrors the kernel's bf16/f32 numerics.
    ref_tight = critic_reference_matched(state, action, params)
    assert jnp.allclose(out, ref_tight, atol=1e-4, rtol=1e-3), (out, ref_tight)

    # Loose check vs the exact f32 semantics (slack accounts for bf16 matmuls).
    ref_f32 = critic_reference_f32(state, action, params)
    assert jnp.allclose(out, ref_f32, atol=5e-3, rtol=5e-2), (out, ref_f32)

    print("KERNEL_OK")
</pallas_src>

<mosaic_0001>
module attributes {stable_mosaic.version = 11 : i64} {
  func.func @stats_kernel(%arg0: i32, %arg1: memref<8x16xbf16, #tpu.memory_space<vmem>>, %arg2: memref<16x128xbf16, #tpu.memory_space<vmem>>, %arg3: memref<1x128xf32, #tpu.memory_space<vmem>>, %arg4: memref<1x1x128xf32, #tpu.memory_space<vmem>>, %arg5: memref<1x1x128xf32, #tpu.memory_space<vmem>>) attributes {dimension_semantics = [#tpu.dimension_semantics<parallel>], iteration_bounds = array<i64: 1>, scalar_prefetch = 0 : i64, scratch_operands = 0 : i64, tpu.core_type = #tpu.core_type<tc>, window_params = [{transform_indices = @transform_0, window_bounds = array<i64: 8, 16>}, {pipeline_mode = #tpu.pipeline_mode<synchronous>, transform_indices = @transform_1, window_bounds = array<i64: 16, 128>}, {pipeline_mode = #tpu.pipeline_mode<synchronous>, transform_indices = @transform_2, window_bounds = array<i64: 1, 128>}, {transform_indices = @transform_3, window_bounds = array<i64: 1, 1, 128>}, {transform_indices = @transform_4, window_bounds = array<i64: 1, 1, 128>}]} {
    %c0 = arith.constant 0 : index
    %c0_0 = arith.constant 0 : index
    %0 = vector.load %arg1[%c0, %c0_0] : memref<8x16xbf16, #tpu.memory_space<vmem>>, vector<8x16xbf16>
    %c0_1 = arith.constant 0 : index
    %c0_2 = arith.constant 0 : index
    %1 = vector.load %arg2[%c0_1, %c0_2] : memref<16x128xbf16, #tpu.memory_space<vmem>>, vector<16x128xbf16>
    %cst = arith.constant dense<0.000000e+00> : vector<8x128xf32>
    %2 = tpu.matmul %0, %1, %cst {dimension_numbers = #tpu.dot_dimension_numbers<[1], [0], [0], [1], [0, 0, 1, 1], [], []>} : vector<8x16xbf16>, vector<16x128xbf16>, vector<8x128xf32> -> vector<8x128xf32>
    %c0_3 = arith.constant 0 : index
    %c0_4 = arith.constant 0 : index
    %3 = vector.load %arg3[%c0_3, %c0_4] : memref<1x128xf32, #tpu.memory_space<vmem>>, vector<1x128xf32>
    %4 = vector.broadcast %3 : vector<1x128xf32> to vector<8x128xf32>
    %5 = arith.addf %2, %4 : vector<8x128xf32>
    %cst_5 = arith.constant 0.000000e+00 : f32
    %6 = vector.broadcast %cst_5 : f32 to vector<8x128xf32>
    %7 = arith.maximumf %5, %6 : vector<8x128xf32>
    %cst_6 = arith.constant dense<0.000000e+00> : vector<128xf32>
    %8 = vector.multi_reduction <add>, %7, %cst_6 [0] : vector<8x128xf32> to vector<128xf32>
    %9 = vector.shape_cast %8 : vector<128xf32> to vector<1x128xf32>
    %10 = arith.mulf %7, %7 : vector<8x128xf32>
    %cst_7 = arith.constant dense<0.000000e+00> : vector<128xf32>
    %11 = vector.multi_reduction <add>, %10, %cst_7 [0] : vector<8x128xf32> to vector<128xf32>
    %12 = vector.shape_cast %11 : vector<128xf32> to vector<1x128xf32>
    %13 = vector.shape_cast %9 : vector<1x128xf32> to vector<1x1x128xf32>
    %c0_8 = arith.constant 0 : index
    %c0_9 = arith.constant 0 : index
    %c0_10 = arith.constant 0 : index
    %14 = vector.load %arg4[%c0_8, %c0_9, %c0_10] : memref<1x1x128xf32, #tpu.memory_space<vmem>>, vector<1x1x128xf32>
    tpu.vector_store %arg4[%c0_8, %c0_9, %c0_10], %13 {strides = array<i32>} : memref<1x1x128xf32, #tpu.memory_space<vmem>>, vector<1x1x128xf32>,
    %15 = vector.shape_cast %12 : vector<1x128xf32> to vector<1x1x128xf32>
    %c0_11 = arith.constant 0 : index
    %c0_12 = arith.constant 0 : index
    %c0_13 = arith.constant 0 : index
    %16 = vector.load %arg5[%c0_11, %c0_12, %c0_13] : memref<1x1x128xf32, #tpu.memory_space<vmem>>, vector<1x1x128xf32>
    tpu.vector_store %arg5[%c0_11, %c0_12, %c0_13], %15 {strides = array<i32>} : memref<1x1x128xf32, #tpu.memory_space<vmem>>, vector<1x1x128xf32>,
    return
  }
  func.func @transform_0(%arg0: i32) -> (i32, i32) {
    %c0_i32 = arith.constant 0 : i32
    %c0_i32_0 = arith.constant 0 : i32
    return %arg0, %c0_i32 : i32, i32
  }
  func.func @transform_1(%arg0: i32) -> (i32, i32) {
    %c0_i32 = arith.constant 0 : i32
    %c0_i32_0 = arith.constant 0 : i32
    %c0_i32_1 = arith.constant 0 : i32
    return %c0_i32, %c0_i32_0 : i32, i32
  }
  func.func @transform_2(%arg0: i32) -> (i32, i32) {
    %c0_i32 = arith.constant 0 : i32
    %c0_i32_0 = arith.constant 0 : i32
    %c0_i32_1 = arith.constant 0 : i32
    return %c0_i32, %c0_i32_0 : i32, i32
  }
  func.func @transform_3(%arg0: i32) -> (i32, i32, i32) {
    %c0_i32 = arith.constant 0 : i32
    %c0_i32_0 = arith.constant 0 : i32
    %c0_i32_1 = arith.constant 0 : i32
    return %arg0, %c0_i32, %c0_i32_0 : i32, i32, i32
  }
  func.func @transform_4(%arg0: i32) -> (i32, i32, i32) {
    %c0_i32 = arith.constant 0 : i32
    %c0_i32_0 = arith.constant 0 : i32
    %c0_i32_1 = arith.constant 0 : i32
    return %arg0, %c0_i32, %c0_i32_0 : i32, i32, i32
  }
}

</mosaic_0001>

<llo_original>
// kernel: tpu_custom_call.1
$region0: #{tpu_custom_call.1}
  #allocation0 [shape = 'u32[]', space=smem, size = 0x4, offset = 0x4, fixed_abs, tag = 'smem constant byte address 0x4 - core index']
  #allocation1 [shape = 'u32[144,128]{1,0:T(1,128)}', space=vmem, size = 0x12000, scoped, tag = 'internal scratch']
  %s0 = inlined_call_operand.hbm [shape: bf16[8,16], index: 0, kind: input, shape index: {}]
  %s1 = inlined_call_operand.hbm [shape: bf16[16,128], index: 1, kind: input, shape index: {}]
  %s2 = inlined_call_operand.vmem [shape: f32[1,128], index: 2, kind: input, shape index: {}]
  %s3 = inlined_call_operand.hbm [shape: f32[1,1,128], index: 3, kind: output, shape index: {0}]
  %s4 = inlined_call_operand.hbm [shape: f32[1,1,128], index: 4, kind: output, shape index: {1}]
  %5 = xla_tuple %s3, %s4
  %s6 = sld [smem:[#allocation0]]
  $region38: #{tpu_custom_call.1} parent=0
    _
  %s8 = ssub.s32 1, %s6
  %s9 = scalar_select 0, %s8, %s6
  $region1: #{tpu_custom_call.1} parent=0
    #allocation2 [shape = 'u8[2048]{0}', space=vmem, size = 0x800, scoped, tag = 'input window, operand 0, single buffered']
    #allocation3 [shape = 's32[1]{0}', space=sflag, size = 0x4, scoped, tag = 'scoped memory for tpu_custom_call.1']
    #allocation4 [shape = 's32[1]{0}', space=sflag, size = 0x4, scoped, tag = 'scoped memory for tpu_custom_call.1']
    #allocation5 [shape = 'u8[4096]{0}', space=vmem, size = 0x1000, scoped, tag = 'input window, operand 1, single buffered']
    #allocation6 [shape = 's32[1]{0}', space=sflag, size = 0x4, scoped, tag = 'scoped memory for tpu_custom_call.1']
    #allocation7 [shape = 'u8[512]{0}', space=vmem, size = 0x400, scoped, tag = 'output window, operand 0, single buffered']
    #allocation8 [shape = 'u8[512]{0}', space=vmem, size = 0x400, scoped, tag = 'output window, operand 1, single buffered']
    #allocation9 [shape = 's32[1]{0}', space=sflag, size = 0x4, scoped, tag = 'scoped memory for tpu_custom_call.1']
    %10 = vsyncpa [#allocation3], 0
    %11 = vsyncpa [#allocation6], 0
    %12 = vsyncpa [#allocation4], 0
    %13 = vsyncpa [#allocation9], 0
    // Predicated region
    $region2: #{tpu_custom_call.1} parent=1 // pred_check
      _
    $region3: #{tpu_custom_call.1} parent=1 // pred_check_branch
      %15 = sbr.rel (0) target = $region5
    $region4: #{tpu_custom_call.1} parent=1 // pred_region
      %s17 = ssub.s32 64, 64
      %18 = vsyncadd [#allocation3], %s17
      %s20 = sshll.u32 [#allocation2], 4
      %s21 = int_to_ptr.vmem [resolvable:$true] %s20
      %23 = dma.hbm_to_vmem [thread:$0]  %s0, 64, %s21, [#allocation3]
    $region5: #{tpu_custom_call.1} parent=1 // pred_fallthru
      _
    // Predicated region
    $region6: #{tpu_custom_call.1} parent=1 // pred_check
      _
    $region7: #{tpu_custom_call.1} parent=1 // pred_check_branch
      %25 = sbr.rel (0) target = $region9
    $region8: #{tpu_custom_call.1} parent=1 // pred_region
      %s27 = ssub.s32 128, 128
      %28 = vsyncadd [#allocation6], %s27
      %s29 = sshll.u32 [#allocation5], 4
      %s30 = int_to_ptr.vmem [resolvable:$true] %s29
      %35 = dma.hbm_to_vmem [thread:$0]  %s1, 128, %s30, [#allocation6], 64, 64, 4
    $region9: #{tpu_custom_call.1} parent=1 // pred_fallthru
      _
    // Predicated region
    $region10: #{tpu_custom_call.1} parent=1 // pred_check
      _
    $region11: #{tpu_custom_call.1} parent=1 // pred_check_branch
      %37 = sbr.rel (0) target = $region13
    $region12: #{tpu_custom_call.1} parent=1 // pred_region
      _
    $region13: #{tpu_custom_call.1} parent=1 // pred_fallthru
      _
    // Predicated region
    $region14: #{tpu_custom_call.1} parent=1 // pred_check
      _
    $region15: #{tpu_custom_call.1} parent=1 // pred_check_branch
      %39 = sbr.rel (0) target = $region17
    $region16: #{tpu_custom_call.1} parent=1 // pred_region
      %40 = dma.done [#allocation3], 64
    $region17: #{tpu_custom_call.1} parent=1 // pred_fallthru
      _
    // Predicated region
    $region18: #{tpu_custom_call.1} parent=1 // pred_check
      _
    $region19: #{tpu_custom_call.1} parent=1 // pred_check_branch
      %42 = sbr.rel (0) target = $region21
    $region20: #{tpu_custom_call.1} parent=1 // pred_region
      %43 = dma.done [#allocation6], 128
    $region21: #{tpu_custom_call.1} parent=1 // pred_fallthru
      _
    %v45 = vld [vmem:[#allocation2] sm:$0xf]
    %v46 = vld [vmem:[#allocation5] sm:$0xf]
    %v47 = vld [vmem:[#allocation5 + $0x4] sm:$0xf]
    %v48 = vld [vmem:[%s2] sm:$0x1]
    %v50 = vlaneseq
    %v51 = vshrl.u32 %v50, 7
    %v52 = vsub.s32 0, %v51
    %v53 = vrot.slane %v48, %v52
    %v57 = vunpack.c.l.b16 %v46
    %v58 = vunpack.c.l.b16 %v47
    %v59 = vpack.c.b16 %v58, %v57
    %vm61 = vcmask 130048
    %v63 = vsel %vm61, %v45, 0
    %65 = vmatprep.subr.bf16.mxu0 0
    %66 = vmatpush1.bf16.msra.mxu0 %v59
    %67 = vmatprep.subr.bf16.mxu0 0
    %68 = vmatpush1.bf16.msra.mxu0 0
    %69 = vmatprep.subr.bf16.mxu0 0
    %70 = vmatpush1.bf16.msra.mxu0 0
    %71 = vmatprep.subr.bf16.mxu0 0
    %72 = vmatpush1.bf16.msra.mxu0 0
    %73 = vmatprep.subr.bf16.mxu0 0
    %74 = vmatpush1.bf16.msra.mxu0 0
    %75 = vmatprep.subr.bf16.mxu0 0
    %76 = vmatpush1.bf16.msra.mxu0 0
    %77 = vmatprep.subr.bf16.mxu0 0
    %78 = vmatpush1.bf16.msra.mxu0 0
    %79 = vmatprep.subr.bf16.mxu0 0
    %80 = vmatpush1.bf16.msra.mxu0 0
    %81 = vmatprep.subr.bf16.mxu0 0
    %82 = vmatpush1.bf16.msra.mxu0 0
    %83 = vmatprep.subr.bf16.mxu0 0
    %84 = vmatpush1.bf16.msra.mxu0 0
    %85 = vmatprep.subr.bf16.mxu0 0
    %86 = vmatpush1.bf16.msra.mxu0 0
    %87 = vmatprep.subr.bf16.mxu0 0
    %88 = vmatpush1.bf16.msra.mxu0 0
    %89 = vmatprep.subr.bf16.mxu0 0
    %90 = vmatpush1.bf16.msra.mxu0 0
    %91 = vmatprep.subr.bf16.mxu0 0
    %92 = vmatpush1.bf16.msra.mxu0 0
    %93 = vmatprep.subr.bf16.mxu0 0
    %94 = vmatpush1.bf16.msra.mxu0 0
    %95 = vmatprep.subr.bf16.mxu0 0
    %96 = vmatpush1.bf16.msra.mxu0 0
    %97 = vmatprep.mubr.bf16.mxu0 0
    %98 = vmatmul.mubr.bf16.gmra.mrb[0].mxu0 %v63
    %v99 = vpop.f32.mrb[0].mxu0
    %v100 = vadd.f32 %v53, %v99
    %v101 = vpop.f32.mrb[0].mxu0
    %v102 = vpop.f32.mrb[0].mxu0
    %v103 = vpop.f32.mrb[0].mxu0
    %104 = vdwg.mxu0
    %v105 = vmax.f32 %v100, 0.0
    %v106 = vrot.slane %v105, 4
    %v107 = vadd.f32 %v105, %v106
    %v108 = vrot.slane %v107, 2
    %v109 = vadd.f32 %v107, %v108
    %v110 = vrot.slane %v109, 1
    %v111 = vadd.f32 %v109, %v110
    %v112 = vmul.f32 %v105, %v105
    %v113 = vrot.slane %v112, 4
    %v114 = vadd.f32 %v112, %v113
    %v115 = vrot.slane %v114, 2
    %v116 = vadd.f32 %v114, %v115
    %v117 = vrot.slane %v116, 1
    %v118 = vadd.f32 %v116, %v117
    %119 = vst [vmem:[#allocation7] sm:$0x1] %v111
    %120 = vst [vmem:[#allocation8] sm:$0x1] %v118
    // Predicated region
    $region22: #{tpu_custom_call.1} parent=1 // pred_check
      _
    $region23: #{tpu_custom_call.1} parent=1 // pred_check_branch
      %122 = sbr.rel (0) target = $region25
    $region24: #{tpu_custom_call.1} parent=1 // pred_region
      %s124 = ssub.s32 16, 16
      %125 = vsyncadd [#allocation4], %s124
      %s127 = sshll.u32 [#allocation7], 4
      %s128 = int_to_ptr.vmem [resolvable:$true] %s127
      %130 = dma.vmem_to_hbm [thread:$0]  %s128, 16, %s3, [#allocation4]
    $region25: #{tpu_custom_call.1} parent=1 // pred_fallthru
      _
    // Predicated region
    $region26: #{tpu_custom_call.1} parent=1 // pred_check
      _
    $region27: #{tpu_custom_call.1} parent=1 // pred_check_branch
      %132 = sbr.rel (0) target = $region29
    $region28: #{tpu_custom_call.1} parent=1 // pred_region
      %s134 = ssub.s32 16, 16
      %135 = vsyncadd [#allocation9], %s134
      %s137 = sshll.u32 [#allocation8], 4
      %s138 = int_to_ptr.vmem [resolvable:$true] %s137
      %140 = dma.vmem_to_hbm [thread:$0]  %s138, 16, %s4, [#allocation9]
    $region29: #{tpu_custom_call.1} parent=1 // pred_fallthru
      _
    // Predicated region
    $region30: #{tpu_custom_call.1} parent=1 // pred_check
      _
    $region31: #{tpu_custom_call.1} parent=1 // pred_check_branch
      %142 = sbr.rel (0) target = $region33
    $region32: #{tpu_custom_call.1} parent=1 // pred_region
      %143 = dma.done [#allocation4], 16
    $region33: #{tpu_custom_call.1} parent=1 // pred_fallthru
      _
    // Predicated region
    $region34: #{tpu_custom_call.1} parent=1 // pred_check
      _
    $region35: #{tpu_custom_call.1} parent=1 // pred_check_branch
      %145 = sbr.rel (0) target = $region37
    $region36: #{tpu_custom_call.1} parent=1 // pred_region
      %146 = dma.done [#allocation9], 16
    $region37: #{tpu_custom_call.1} parent=1 // pred_fallthru
      _
    %147 = vsyncpa [#allocation3], 1
    %148 = vsyncpa [#allocation6], 1
    %149 = vsyncpa [#allocation4], 1
    %150 = vsyncpa [#allocation9], 1

</llo_original>
